<compile_context>
chip_gen: v6e
topology: v6e:2x2x1
jax: 0.10.0
libtpu: 0.0.40
codegen_flags: <defaults>
</compile_context>

<pallas_src>
import functools
import math

import jax
import jax.numpy as jnp
import numpy as np
from jax.experimental import pallas as pl
from jax.experimental.pallas import tpu as pltpu


# Use the fused (Kronecker) single-matmul path while the fused weight stays
# small (<= 1 MiB in f32); beyond that, fall back to the separable path.
_FUSED_WEIGHT_MAX_ELEMS = 256 * 1024


def _cdiv(a, b):
    return -(-a // b)


def _interp_matrix(out_size: int, in_size: int) -> np.ndarray:
    """PyTorch-style bilinear weights, align_corners=False (host, float64)."""
    i = np.arange(out_size, dtype=np.float64)
    scale = in_size / out_size
    src = np.maximum((i + 0.5) * scale - 0.5, 0.0)          # PyTorch clamps src >= 0
    i0 = np.minimum(np.floor(src).astype(np.int64), in_size - 1)
    i1 = np.minimum(i0 + 1, in_size - 1)
    frac = src - i0
    w = np.zeros((out_size, in_size), dtype=np.float64)
    rows = np.arange(out_size)
    np.add.at(w, (rows, i0), 1.0 - frac)
    np.add.at(w, (rows, i1), frac)
    return w


@functools.lru_cache(maxsize=None)
def _tpu_mem_plan():
    """(vmem_limit_bytes, per-step working-set budget) — generation aware."""
    cap = None
    try:
        cap = int(pltpu.get_tpu_info().vmem_capacity_bytes)
    except Exception:
        cap = None
    if not cap:
        cap = 64 * 1024 * 1024                       # conservative (v7x per-TC VMEM)
    vmem_limit = min((cap * 3) // 4, 96 * 1024 * 1024)   # 48 MiB on v7x, 96 MiB on v5e/v6e
    return vmem_limit, vmem_limit // 2


@functools.lru_cache(maxsize=None)
def _num_tensorcores():
    """2 on v7x-style multi-TC parts, else 1 (v5e/v6e are single-TC)."""
    try:
        kind = jax.devices()[0].device_kind.lower()
    except Exception:
        return 1
    return 2 if "v7" in kind else 1


def _plan_blocks(p, per_plane_bytes, fixed_bytes, budget, align, num_tc):
    """Planes per grid step (b) and number of steps, preferring zero padding."""
    avail = max(budget - fixed_bytes, per_plane_bytes)
    b_max = max(1, int(avail // per_plane_bytes))
    # Force >=2 steps only where grid sharding across TensorCores exists (v7x);
    # on single-TC parts extra steps are pure overhead.
    want = num_tc if (num_tc > 1 and p >= 2 * align) else 1
    if b_max >= p and want == 1:
        return p, 1                                  # one step, block == full array, no pad
    n_blocks = max(want, _cdiv(p, b_max))
    b = _cdiv(p, n_blocks)
    b = max(align, _cdiv(b, align) * align)          # layout-friendly sublane dim
    return b, _cdiv(p, b)


def _resize_fused_kernel(x_ref, w_ref, o_ref):
    # x_ref: (B, H_in*W_in)  w_ref: (H_in*W_in, H_out*W_out)  o_ref: (B, H_out*W_out)
    # Single lane-dense MXU matmul, f32 accumulation; bf16 inputs stay on the
    # fast bf16 MXU path (weight is cast to the input dtype in the wrapper).
    o_ref[...] = jnp.dot(x_ref[...], w_ref[...],
                         preferred_element_type=jnp.float32).astype(o_ref.dtype)


def _resize_separable_kernel(x_ref, wwt_ref, wh_ref, o_ref):
    # x_ref: (B*H_in, W_in)  wwt_ref: (W_in, W_out)  wh_ref: (H_out, H_in) f32
    # o_ref: (B, H_out, W_out)
    b, h_out, w_out = o_ref.shape
    h_in = wh_ref.shape[1]
    # (1) W-interp: one big-M 2-D matmul over all B*H_in rows, f32 accumulate.
    y = jnp.dot(x_ref[...], wwt_ref[...],
                preferred_element_type=jnp.float32)              # (B*H_in, W_out)
    y = y.reshape(b, h_in, w_out)                                # split leading dim
    # (2) H-interp: batched matmul with Wh broadcast in-kernel (no HBM broadcast,
    #     no doubled weight VMEM); f32 end-to-end, no bf16 intermediate rounding.
    whb = jnp.broadcast_to(wh_ref[...][None], (b, h_out, h_in))
    out = jax.lax.dot_general(whb, y,
                              dimension_numbers=(((2,), (1,)), ((0,), (0,))),
                              preferred_element_type=jnp.float32)  # (B, H_out, W_out)
    o_ref[...] = out.astype(o_ref.dtype)


@functools.partial(jax.jit, static_argnums=(1,))
def resize_bilinear(x: jnp.ndarray, size) -> jnp.ndarray:
    """Equivalent of the reference Resize(size)(x) for NCHW or CHW inputs."""
    squeeze = x.ndim == 3
    if squeeze:
        x = x[None]
    n, c, h_in, w_in = x.shape
    h_out, w_out = size
    p = n * c
    dt = x.dtype
    itemsize = jnp.dtype(dt).itemsize
    pack = max(8, 32 // itemsize)            # sublane packing: f32 8, bf16 16, int8 32

    vmem_limit, budget = _tpu_mem_plan()
    num_tc = _num_tensorcores()

    wh = _interp_matrix(h_out, h_in)         # (H_out, H_in) host float64
    ww = _interp_matrix(w_out, w_in)         # (W_out, W_in) host float64

    k_dim = h_in * w_in
    n_dim = h_out * w_out

    if k_dim * n_dim <= _FUSED_WEIGHT_MAX_ELEMS:
        # --- Fused single-matmul path (small spatial sizes) ---
        w_np = np.einsum("oh,pw->hwop", wh, ww).reshape(k_dim, n_dim)
        w_fused = jnp.asarray(w_np, dtype=dt)

        per_plane = 2 * (k_dim + n_dim) * itemsize + 4 * n_dim   # dbl-buffered io + f32 acc
        fixed = 2 * k_dim * n_dim * itemsize                     # resident weight (2 bufs)
        b, n_blocks = _plan_blocks(p, per_plane, fixed, budget, pack, num_tc)
        p_pad = b * n_blocks

        x2d = x.reshape(p, k_dim)                                # free, row-major
        if p_pad != p:
            x2d = jnp.pad(x2d, ((0, p_pad - p), (0, 0)))

        out_flat = pl.pallas_call(
            _resize_fused_kernel,
            out_shape=jax.ShapeDtypeStruct((p_pad, n_dim), dt),
            grid_spec=pltpu.PrefetchScalarGridSpec(
                num_scalar_prefetch=0,
                grid=(n_blocks,),
                in_specs=[
                    pl.BlockSpec((b, k_dim), lambda i: (i, 0)),
                    # Constant index_map -> DMA'd once, resident in VMEM.
                    pl.BlockSpec((k_dim, n_dim), lambda i: (0, 0)),
                ],
                out_specs=pl.BlockSpec((b, n_dim), lambda i: (i, 0)),
            ),
            compiler_params=pltpu.CompilerParams(
                dimension_semantics=("parallel",),
                vmem_limit_bytes=vmem_limit,
            ),
            cost_estimate=pl.CostEstimate(
                flops=int(2 * p * k_dim * n_dim),
                transcendentals=0,
                bytes_accessed=int((p * (k_dim + n_dim) + k_dim * n_dim) * itemsize),
            ),
        )(x2d, w_fused)

        if p_pad != p:
            out_flat = out_flat[:p]
        out = out_flat.reshape(n, c, h_out, w_out)               # free, row-major
    else:
        # --- Separable two-matmul fallback (large spatial sizes) ---
        wwt = jnp.asarray(ww.T, dtype=dt)                        # (W_in, W_out)
        wh2 = jnp.asarray(wh, dtype=jnp.float32)                 # (H_out, H_in)

        per_plane = (2 * (h_in * w_in + h_out * w_out) * itemsize
                     + 4 * (h_in * w_out + h_out * h_in + h_out * w_out))
        fixed = 2 * (w_in * w_out * itemsize + h_out * h_in * 4)
        align = pack // math.gcd(pack, h_in)     # keep b*H_in sublane aligned
        b, n_blocks = _plan_blocks(p, per_plane, fixed, budget, align, num_tc)
        p_pad = b * n_blocks

        x2d = x.reshape(p * h_in, w_in)                          # free, row-major
        if p_pad != p:
            x2d = jnp.pad(x2d, ((0, (p_pad - p) * h_in), (0, 0)))

        out_planes = pl.pallas_call(
            _resize_separable_kernel,
            out_shape=jax.ShapeDtypeStruct((p_pad, h_out, w_out), dt),
            grid_spec=pltpu.PrefetchScalarGridSpec(
                num_scalar_prefetch=0,
                grid=(n_blocks,),
                in_specs=[
                    pl.BlockSpec((b * h_in, w_in), lambda i: (i, 0)),
                    pl.BlockSpec((w_in, w_out), lambda i: (0, 0)),   # resident
                    pl.BlockSpec((h_out, h_in), lambda i: (0, 0)),   # resident
                ],
                out_specs=pl.BlockSpec((b, h_out, w_out), lambda i: (i, 0, 0)),
            ),
            compiler_params=pltpu.CompilerParams(
                dimension_semantics=("parallel",),
                vmem_limit_bytes=vmem_limit,
            ),
            cost_estimate=pl.CostEstimate(
                flops=int(2 * p * (h_in * w_in * w_out + h_out * h_in * w_out)),
                transcendentals=0,
                bytes_accessed=int((p * (h_in * w_in + h_out * w_out)
                                    + w_in * w_out + h_out * h_in) * itemsize),
            ),
        )(x2d, wwt, wh2)

        if p_pad != p:
            out_planes = out_planes[:p]
        out = out_planes.reshape(n, c, h_out, w_out)

    if squeeze:
        out = out[0]
    return out


if __name__ == "__main__":
    key = jax.random.PRNGKey(0)
    x = jax.random.normal(key, (2, 4, 16, 16), dtype=jnp.float32)
    size = (24, 10)  # upsample H, downsample W  -> fused single-matmul path

    out = jax.block_until_ready(resize_bilinear(x, size))
    assert out.shape == (2, 4, 24, 10), out.shape

    # Host float64 reference of the same bilinear (align_corners=False) formula.
    def ref_resize_nchw(xnp, sz):
        ho, wo = sz
        whr = _interp_matrix(ho, xnp.shape[2])
        wwr = _interp_matrix(wo, xnp.shape[3])
        return np.einsum("oh,nchw,pw->ncop", whr, xnp.astype(np.float64), wwr)

    ref = ref_resize_nchw(np.asarray(x), size)
    # Tolerance covers the TPU MXU's default (bf16-pass) precision for f32 dots.
    assert np.max(np.abs(np.asarray(out, np.float64) - ref)) < 6e-2

    # 3-D (C, H, W) path of the module.
    out3 = jax.block_until_ready(resize_bilinear(x[0], size))
    assert out3.shape == (4, 24, 10), out3.shape
    assert np.max(np.abs(np.asarray(out3, np.float64) - ref[0])) < 6e-2

    # bf16 path: weights cast to bf16, f32 accumulation on the MXU.
    out_bf16 = jax.block_until_ready(resize_bilinear(x.astype(jnp.bfloat16), size))
    assert out_bf16.shape == (2, 4, 24, 10), out_bf16.shape
    assert np.max(np.abs(np.asarray(out_bf16, np.float64) - ref)) < 0.25

    # Larger spatial size exercises the separable (two-matmul) fallback path.
    x_big = jax.random.normal(jax.random.PRNGKey(1), (1, 2, 64, 64), dtype=jnp.float32)
    out_big = jax.block_until_ready(resize_bilinear(x_big, (96, 96)))
    assert out_big.shape == (1, 2, 96, 96), out_big.shape
    ref_big = ref_resize_nchw(np.asarray(x_big), (96, 96))
    assert np.max(np.abs(np.asarray(out_big, np.float64) - ref_big)) < 6e-2

    print("KERNEL_OK")
</pallas_src>

<mosaic_0001>
module attributes {stable_mosaic.version = 11 : i64} {
  func.func @_resize_fused_kernel(%arg0: i32, %arg1: memref<8x256xf32, #tpu.memory_space<vmem>>, %arg2: memref<256x240xf32, #tpu.memory_space<vmem>>, %arg3: memref<8x240xf32, #tpu.memory_space<vmem>>) attributes {dimension_semantics = [#tpu.dimension_semantics<parallel>], iteration_bounds = array<i64: 1>, scalar_prefetch = 0 : i64, scratch_operands = 0 : i64, tpu.core_type = #tpu.core_type<tc>, window_params = [{transform_indices = @transform_0, window_bounds = array<i64: 8, 256>}, {pipeline_mode = #tpu.pipeline_mode<synchronous>, transform_indices = @transform_1, window_bounds = array<i64: 256, 240>}, {transform_indices = @transform_2, window_bounds = array<i64: 8, 240>}]} {
    %c0 = arith.constant 0 : index
    %c0_0 = arith.constant 0 : index
    %0 = vector.load %arg1[%c0, %c0_0] : memref<8x256xf32, #tpu.memory_space<vmem>>, vector<8x256xf32>
    %c0_1 = arith.constant 0 : index
    %c0_2 = arith.constant 0 : index
    %1 = vector.load %arg2[%c0_1, %c0_2] : memref<256x240xf32, #tpu.memory_space<vmem>>, vector<256x240xf32>
    %cst = arith.constant dense<0.000000e+00> : vector<8x240xf32>
    %2 = tpu.matmul %0, %1, %cst {dimension_numbers = #tpu.dot_dimension_numbers<[1], [0], [0], [1], [0, 0, 1, 1], [], []>} : vector<8x256xf32>, vector<256x240xf32>, vector<8x240xf32> -> vector<8x240xf32>
    %c0_3 = arith.constant 0 : index
    %c0_4 = arith.constant 0 : index
    %3 = vector.load %arg3[%c0_3, %c0_4] : memref<8x240xf32, #tpu.memory_space<vmem>>, vector<8x240xf32>
    tpu.vector_store %arg3[%c0_3, %c0_4], %2 {strides = array<i32>} : memref<8x240xf32, #tpu.memory_space<vmem>>, vector<8x240xf32>,
    return
  }
  func.func @transform_0(%arg0: i32) -> (i32, i32) {
    %c0_i32 = arith.constant 0 : i32
    %c0_i32_0 = arith.constant 0 : i32
    return %arg0, %c0_i32 : i32, i32
  }
  func.func @transform_1(%arg0: i32) -> (i32, i32) {
    %c0_i32 = arith.constant 0 : i32
    %c0_i32_0 = arith.constant 0 : i32
    %c0_i32_1 = arith.constant 0 : i32
    return %c0_i32, %c0_i32_0 : i32, i32
  }
  func.func @transform_2(%arg0: i32) -> (i32, i32) {
    %c0_i32 = arith.constant 0 : i32
    %c0_i32_0 = arith.constant 0 : i32
    return %arg0, %c0_i32 : i32, i32
  }
}

</mosaic_0001>

<llo_original>
// kernel: resize_bilinear.1
$region0: #{resize_bilinear.1}
  #allocation0 [shape = 'u32[]', space=smem, size = 0x4, offset = 0x4, fixed_abs, tag = 'smem constant byte address 0x4 - core index']
  #allocation1 [shape = 'u32[144,128]{1,0:T(1,128)}', space=vmem, size = 0x12000, scoped, tag = 'internal scratch']
  %s0 = inlined_call_operand.vmem [shape: f32[8,256], index: 0, kind: input, shape index: {}]
  %s1 = inlined_call_operand.hbm [shape: f32[256,240], index: 1, kind: input, shape index: {}]
  %s2 = inlined_call_operand.vmem [shape: f32[8,240], index: 2, kind: output, shape index: {}]
  %s3 = sld [smem:[#allocation0]]
  $region22: #{resize_bilinear.1} parent=0
    _
  %s5 = ssub.s32 1, %s3
  %s6 = scalar_select 0, %s5, %s3
  $region1: #{resize_bilinear.1} parent=0
    #allocation2 [shape = 'u8[262144]{0}', space=vmem, size = 0x40000, scoped, tag = 'input window, operand 1, single buffered']
    #allocation3 [shape = 's32[1]{0}', space=sflag, size = 0x4, scoped, tag = 'scoped memory for resize_bilinear.1']
    %7 = vsyncpa [#allocation3], 0
    // Predicated region
    $region2: #{resize_bilinear.1} parent=1 // pred_check
      _
    $region3: #{resize_bilinear.1} parent=1 // pred_check_branch
      %9 = sbr.rel (0) target = $region5
    $region4: #{resize_bilinear.1} parent=1 // pred_region
      _
    $region5: #{resize_bilinear.1} parent=1 // pred_fallthru
      _
    // Predicated region
    $region6: #{resize_bilinear.1} parent=1 // pred_check
      _
    $region7: #{resize_bilinear.1} parent=1 // pred_check_branch
      %11 = sbr.rel (0) target = $region9
    $region8: #{resize_bilinear.1} parent=1 // pred_region
      %s13 = ssub.s32 8192, 8192
      %14 = vsyncadd [#allocation3], %s13
      %s15 = sshll.u32 [#allocation2], 4
      %s16 = int_to_ptr.vmem [resolvable:$true] %s15
      %21 = dma.hbm_to_vmem [thread:$0]  %s1, 8192, %s16, [#allocation3], 256, 256, 16
    $region9: #{resize_bilinear.1} parent=1 // pred_fallthru
      _
    // Predicated region
    $region10: #{resize_bilinear.1} parent=1 // pred_check
      _
    $region11: #{resize_bilinear.1} parent=1 // pred_check_branch
      %23 = sbr.rel (0) target = $region13
    $region12: #{resize_bilinear.1} parent=1 // pred_region
      %24 = dma.done [#allocation3], 8192
    $region13: #{resize_bilinear.1} parent=1 // pred_fallthru
      _
    %v25 = vld [vmem:[%s0] sm:$0xff]
    %v26 = vld [vmem:[%s0 + $0x8] sm:$0xff]
    %v27 = vld [vmem:[#allocation2] sm:$0xff]
    %v28 = vld [vmem:[#allocation2 + $0x8] sm:$0xff]
    %v29 = vld [vmem:[#allocation2 + $0x10] sm:$0xff]
    %v30 = vld [vmem:[#allocation2 + $0x18] sm:$0xff]
    %v31 = vld [vmem:[#allocation2 + $0x20] sm:$0xff]
    %v32 = vld [vmem:[#allocation2 + $0x28] sm:$0xff]
    %v33 = vld [vmem:[#allocation2 + $0x30] sm:$0xff]
    %v34 = vld [vmem:[#allocation2 + $0x38] sm:$0xff]
    %v35 = vld [vmem:[#allocation2 + $0x40] sm:$0xff]
    %v36 = vld [vmem:[#allocation2 + $0x48] sm:$0xff]
    %v37 = vld [vmem:[#allocation2 + $0x50] sm:$0xff]
    %v38 = vld [vmem:[#allocation2 + $0x58] sm:$0xff]
    %v39 = vld [vmem:[#allocation2 + $0x60] sm:$0xff]
    %v40 = vld [vmem:[#allocation2 + $0x68] sm:$0xff]
    %v41 = vld [vmem:[#allocation2 + $0x70] sm:$0xff]
    %v42 = vld [vmem:[#allocation2 + $0x78] sm:$0xff]
    %v43 = vld [vmem:[#allocation2 + $0x80] sm:$0xff]
    %v44 = vld [vmem:[#allocation2 + $0x88] sm:$0xff]
    %v45 = vld [vmem:[#allocation2 + $0x90] sm:$0xff]
    %v46 = vld [vmem:[#allocation2 + $0x98] sm:$0xff]
    %v47 = vld [vmem:[#allocation2 + $0xa0] sm:$0xff]
    %v48 = vld [vmem:[#allocation2 + $0xa8] sm:$0xff]
    %v49 = vld [vmem:[#allocation2 + $0xb0] sm:$0xff]
    %v50 = vld [vmem:[#allocation2 + $0xb8] sm:$0xff]
    %v51 = vld [vmem:[#allocation2 + $0xc0] sm:$0xff]
    %v52 = vld [vmem:[#allocation2 + $0xc8] sm:$0xff]
    %v53 = vld [vmem:[#allocation2 + $0xd0] sm:$0xff]
    %v54 = vld [vmem:[#allocation2 + $0xd8] sm:$0xff]
    %v55 = vld [vmem:[#allocation2 + $0xe0] sm:$0xff]
    %v56 = vld [vmem:[#allocation2 + $0xe8] sm:$0xff]
    %v57 = vld [vmem:[#allocation2 + $0xf0] sm:$0xff]
    %v58 = vld [vmem:[#allocation2 + $0xf8] sm:$0xff]
    %v59 = vld [vmem:[#allocation2 + $0x100] sm:$0xff]
    %v60 = vld [vmem:[#allocation2 + $0x108] sm:$0xff]
    %v61 = vld [vmem:[#allocation2 + $0x110] sm:$0xff]
    %v62 = vld [vmem:[#allocation2 + $0x118] sm:$0xff]
    %v63 = vld [vmem:[#allocation2 + $0x120] sm:$0xff]
    %v64 = vld [vmem:[#allocation2 + $0x128] sm:$0xff]
    %v65 = vld [vmem:[#allocation2 + $0x130] sm:$0xff]
    %v66 = vld [vmem:[#allocation2 + $0x138] sm:$0xff]
    %v67 = vld [vmem:[#allocation2 + $0x140] sm:$0xff]
    %v68 = vld [vmem:[#allocation2 + $0x148] sm:$0xff]
    %v69 = vld [vmem:[#allocation2 + $0x150] sm:$0xff]
    %v70 = vld [vmem:[#allocation2 + $0x158] sm:$0xff]
    %v71 = vld [vmem:[#allocation2 + $0x160] sm:$0xff]
    %v72 = vld [vmem:[#allocation2 + $0x168] sm:$0xff]
    %v73 = vld [vmem:[#allocation2 + $0x170] sm:$0xff]
    %v74 = vld [vmem:[#allocation2 + $0x178] sm:$0xff]
    %v75 = vld [vmem:[#allocation2 + $0x180] sm:$0xff]
    %v76 = vld [vmem:[#allocation2 + $0x188] sm:$0xff]
    %v77 = vld [vmem:[#allocation2 + $0x190] sm:$0xff]
    %v78 = vld [vmem:[#allocation2 + $0x198] sm:$0xff]
    %v79 = vld [vmem:[#allocation2 + $0x1a0] sm:$0xff]
    %v80 = vld [vmem:[#allocation2 + $0x1a8] sm:$0xff]
    %v81 = vld [vmem:[#allocation2 + $0x1b0] sm:$0xff]
    %v82 = vld [vmem:[#allocation2 + $0x1b8] sm:$0xff]
    %v83 = vld [vmem:[#allocation2 + $0x1c0] sm:$0xff]
    %v84 = vld [vmem:[#allocation2 + $0x1c8] sm:$0xff]
    %v85 = vld [vmem:[#allocation2 + $0x1d0] sm:$0xff]
    %v86 = vld [vmem:[#allocation2 + $0x1d8] sm:$0xff]
    %v87 = vld [vmem:[#allocation2 + $0x1e0] sm:$0xff]
    %v88 = vld [vmem:[#allocation2 + $0x1e8] sm:$0xff]
    %v89 = vld [vmem:[#allocation2 + $0x1f0] sm:$0xff]
    %v90 = vld [vmem:[#allocation2 + $0x1f8] sm:$0xff]
    %91 = vmatprep.subr.mxu0 %v58
    %92 = vmatpush1.msra.mxu0 %v57
    %93 = vmatprep.subr.mxu0 %v56
    %94 = vmatpush1.msra.mxu0 %v55
    %95 = vmatprep.subr.mxu0 %v54
    %96 = vmatpush1.msra.mxu0 %v53
    %97 = vmatprep.subr.mxu0 %v52
    %98 = vmatpush1.msra.mxu0 %v51
    %99 = vmatprep.subr.mxu0 %v50
    %100 = vmatpush1.msra.mxu0 %v49
    %101 = vmatprep.subr.mxu0 %v48
    %102 = vmatpush1.msra.mxu0 %v47
    %103 = vmatprep.subr.mxu0 %v46
    %104 = vmatpush1.msra.mxu0 %v45
    %105 = vmatprep.subr.mxu0 %v44
    %106 = vmatpush1.msra.mxu0 %v43
    %107 = vmatprep.subr.mxu0 %v42
    %108 = vmatpush1.msra.mxu0 %v41
    %109 = vmatprep.subr.mxu0 %v40
    %110 = vmatpush1.msra.mxu0 %v39
    %111 = vmatprep.subr.mxu0 %v38
    %112 = vmatpush1.msra.mxu0 %v37
    %113 = vmatprep.subr.mxu0 %v36
    %114 = vmatpush1.msra.mxu0 %v35
    %115 = vmatprep.subr.mxu0 %v34
    %116 = vmatpush1.msra.mxu0 %v33
    %117 = vmatprep.subr.mxu0 %v32
    %118 = vmatpush1.msra.mxu0 %v31
    %119 = vmatprep.subr.mxu0 %v30
    %120 = vmatpush1.msra.mxu0 %v29
    %121 = vmatprep.subr.mxu0 %v28
    %122 = vmatpush1.msra.mxu0 %v27
    %123 = vmatprep.subr.mxu0 %v90
    %124 = vmatpush2.msra.mxu0 %v89
    %125 = vmatprep.subr.mxu0 %v88
    %126 = vmatpush2.msra.mxu0 %v87
    %127 = vmatprep.subr.mxu0 %v86
    %128 = vmatpush2.msra.mxu0 %v85
    %129 = vmatprep.subr.mxu0 %v84
    %130 = vmatpush2.msra.mxu0 %v83
    %131 = vmatprep.subr.mxu0 %v82
    %132 = vmatpush2.msra.mxu0 %v81
    %133 = vmatprep.subr.mxu0 %v80
    %134 = vmatpush2.msra.mxu0 %v79
    %135 = vmatprep.subr.mxu0 %v78
    %136 = vmatpush2.msra.mxu0 %v77
    %137 = vmatprep.subr.mxu0 %v76
    %138 = vmatpush2.msra.mxu0 %v75
    %139 = vmatprep.subr.mxu0 %v74
    %140 = vmatpush2.msra.mxu0 %v73
    %141 = vmatprep.subr.mxu0 %v72
    %142 = vmatpush2.msra.mxu0 %v71
    %143 = vmatprep.subr.mxu0 %v70
    %144 = vmatpush2.msra.mxu0 %v69
    %145 = vmatprep.subr.mxu0 %v68
    %146 = vmatpush2.msra.mxu0 %v67
    %147 = vmatprep.subr.mxu0 %v66
    %148 = vmatpush2.msra.mxu0 %v65
    %149 = vmatprep.subr.mxu0 %v64
    %150 = vmatpush2.msra.mxu0 %v63
    %151 = vmatprep.subr.mxu0 %v62
    %152 = vmatpush2.msra.mxu0 %v61
    %153 = vmatprep.subr.mxu0 %v60
    %154 = vmatpush2.msra.mxu0 %v59
    %155 = vmatprep.mubr.f32.mxu0 %v26
    %156 = vmatmul.mubr.f32.gmra.mxu0 %v25
    %v157 = vpop.f32.mrf.mxu0
    %v158 = vadd.f32 0.0, %v157
    %v159 = vpop.f32.mrf.mxu0
    %v160 = vadd.f32 0.0, %v159
    %161 = vdwg.mxu0
    %162 = vst [vmem:[%s2] sm:$0xff] %v158
    %vm163 = vcmask 916480
    %164 = vst.msk [vmem:[%s2 + $0x8] sm:$0xff] %vm163, %v160
    // Predicated region
    $region14: #{resize_bilinear.1} parent=1 // pred_check
      _
    $region15: #{resize_bilinear.1} parent=1 // pred_check_branch
      %166 = sbr.rel (0) target = $region17
    $region16: #{resize_bilinear.1} parent=1 // pred_region
      _
    $region17: #{resize_bilinear.1} parent=1 // pred_fallthru
      _
    // Predicated region
    $region18: #{resize_bilinear.1} parent=1 // pred_check
      _
    $region19: #{resize_bilinear.1} parent=1 // pred_check_branch
      %168 = sbr.rel (0) target = $region21
    $region20: #{resize_bilinear.1} parent=1 // pred_region
      _
    $region21: #{resize_bilinear.1} parent=1 // pred_fallthru
      _
    %169 = vsyncpa [#allocation3], 1

</llo_original>
